<compile_context>
chip_gen: v5e
topology: v5e:2x2
jax: 0.10.0
libtpu: 0.0.40
codegen_flags: <defaults>
</compile_context>

<pallas_src>
import functools

import jax
import jax.numpy as jnp
from jax.experimental import pallas as pl
from jax.experimental.pallas import tpu as pltpu


def _round_up(v, m):
    return ((v + m - 1) // m) * m


def _global_sa_kernel(x_ref, pos_ref, batch_ref,
                      w1x_ref, w1p_ref, b1_ref,
                      w2_ref, b2_ref, w3_ref, b3_ref,
                      out_ref, *,
                      num_batches, tile_n, n_points, tiles_per_split,
                      compute_dtype, need_row_mask):
    """One TILE_N slab: fused 3x(Linear+ReLU) + masked max-pool accumulate."""
    i = pl.program_id(1)

    @pl.when(i == 0)
    def _init():
        out_ref[...] = jnp.zeros_like(out_ref)

    x = x_ref[...]
    p = pos_ref[...]
    bid = batch_ref[...]                                     # [tile_n, 1] int32

    if need_row_mask:
        # Last tile may overrun N; neutralize out-of-range rows.
        row0 = (pl.program_id(0) * tiles_per_split + i) * tile_n
        rows = row0 + jax.lax.broadcasted_iota(jnp.int32, (tile_n, 1), 0)
        valid = rows < n_points
        x = jnp.where(valid, x, jnp.zeros_like(x))
        p = jnp.where(valid, p, jnp.zeros_like(p))
        bid = jnp.where(valid, bid, -1)

    # Layer 1 as split-K matmul over (x | pos): avoids an HBM concat pass.
    h = (jnp.dot(x.astype(compute_dtype), w1x_ref[...],
                 preferred_element_type=jnp.float32)
         + jnp.dot(p.astype(compute_dtype), w1p_ref[...],
                   preferred_element_type=jnp.float32)
         + b1_ref[...])
    h = jnp.maximum(h, 0.0)
    h = jnp.dot(h.astype(compute_dtype), w2_ref[...],
                preferred_element_type=jnp.float32) + b2_ref[...]
    h = jnp.maximum(h, 0.0)
    h = jnp.dot(h.astype(compute_dtype), w3_ref[...],
                preferred_element_type=jnp.float32) + b3_ref[...]
    h = jnp.maximum(h, 0.0)                                  # h >= 0, [tile_n, c_pad]

    # Segment max-pool via mask-multiply (masked rows contribute 0, h >= 0).
    partials = []
    for b in range(num_batches):                             # B small & static
        m = (bid == b).astype(jnp.float32)                   # [tile_n, 1]
        partials.append(jnp.max(h * m, axis=0, keepdims=True))
    pooled = jnp.concatenate(partials, axis=0)               # [B, c_pad]
    out_ref[...] = jnp.maximum(out_ref[...], pooled[None, :, :])


def global_sa_module(x, pos, batch, params, num_batches, *,
                     tile_n=None, num_splits=2, compute_dtype=jnp.float32):
    """Returns (pooled [B, C_out] f32, pos_out [B, 3], batch_out [B] int32)."""
    w1, b1, w2, b2, w3, b3 = params
    n, c_in = x.shape
    h1 = w1.shape[1]
    h2 = w2.shape[1]
    c_out = w3.shape[1]

    # Pad every layer's output width to a lane multiple (128): padded channels
    # stay exactly 0 through (0-weight, 0-bias, ReLU), so results are unchanged
    # and all matmul outputs / the final store are lane-dense.
    h1_pad = _round_up(h1, 128)
    h2_pad = _round_up(h2, 128)
    c_pad = _round_up(c_out, 128)

    # Weight prep (tiny): split w1 rows for (x | pos); zero-pad output columns.
    w1x = jnp.pad(w1[:c_in], ((0, 0), (0, h1_pad - h1))).astype(compute_dtype)
    w1p = jnp.pad(w1[c_in:], ((0, 0), (0, h1_pad - h1))).astype(compute_dtype)
    w2c = jnp.pad(w2, ((0, h1_pad - h1), (0, h2_pad - h2))).astype(compute_dtype)
    w3c = jnp.pad(w3, ((0, h2_pad - h2), (0, c_pad - c_out))).astype(compute_dtype)
    b1f = jnp.pad(b1.reshape(1, -1),
                  ((0, 0), (0, h1_pad - h1))).astype(jnp.float32)
    b2f = jnp.pad(b2.reshape(1, -1),
                  ((0, 0), (0, h2_pad - h2))).astype(jnp.float32)
    b3f = jnp.pad(b3.reshape(1, -1),
                  ((0, 0), (0, c_pad - c_out))).astype(jnp.float32)
    batch2d = batch.reshape(n, 1).astype(jnp.int32)

    # Tile / split selection.  TILE_N multiple of 8 unless it covers all of N.
    # Sweep per chip: multiples of 256 fill v6e/v7x MXU passes, 128 for v5e.
    if tile_n is None:
        tile_n = 1024
    if tile_n >= n:
        tile_n = n
    else:
        tile_n = max(8, _round_up(tile_n, 8))
    n_tiles = pl.cdiv(n, tile_n)
    if num_splits < 1 or n_tiles % num_splits != 0:
        num_splits = 1                            # fall back to a single stream
    tiles_per_split = n_tiles // num_splits
    need_row_mask = (n % tile_n) != 0

    # VMEM budget: double-buffered input tiles + resident weights + activation
    # headroom.  Keep under v7x's 64 MiB physical VMEM.
    in_b = x.dtype.itemsize
    w_b = jnp.dtype(compute_dtype).itemsize
    est = (2 * tile_n * ((c_in + 3) * in_b + 4)
           + w_b * ((c_in + 3) * h1_pad + h1_pad * h2_pad + h2_pad * c_pad)
           + 4 * (h1_pad + h2_pad + c_pad)
           + 2 * 4 * tile_n * (h1_pad + h2_pad + c_pad)
           + 2 * 4 * num_batches * c_pad)
    vmem_limit = int(min(max(2 * est, 32 * 1024 * 1024), 64 * 1024 * 1024))

    def tile_spec(last):
        return pl.BlockSpec((tile_n, last),
                            lambda c, i: (c * tiles_per_split + i, 0))

    def const_spec(shape):
        return pl.BlockSpec(shape, lambda c, i, _s=len(shape): (0,) * _s)

    kernel = functools.partial(
        _global_sa_kernel,
        num_batches=num_batches, tile_n=tile_n, n_points=n,
        tiles_per_split=tiles_per_split, compute_dtype=compute_dtype,
        need_row_mask=need_row_mask)

    pooled_split = pl.pallas_call(
        kernel,
        grid=(num_splits, tiles_per_split),
        in_specs=[
            tile_spec(c_in),                      # x
            tile_spec(3),                         # pos
            tile_spec(1),                         # batch ids
            const_spec(w1x.shape), const_spec(w1p.shape), const_spec(b1f.shape),
            const_spec(w2c.shape), const_spec(b2f.shape),
            const_spec(w3c.shape), const_spec(b3f.shape),
        ],
        out_specs=pl.BlockSpec((1, num_batches, c_pad),
                               lambda c, i: (c, 0, 0)),
        out_shape=jax.ShapeDtypeStruct((num_splits, num_batches, c_pad),
                                       jnp.float32),
        compiler_params=pltpu.CompilerParams(
            dimension_semantics=("parallel", "arbitrary"),
            vmem_limit_bytes=vmem_limit),
    )(x, pos, batch2d, w1x, w1p, b1f, w2c, b2f, w3c, b3f)

    pooled = jnp.max(pooled_split, axis=0)[:, :c_out]        # [B, C_out]
    pos_out = jnp.zeros((num_batches, 3), dtype=pos.dtype)
    batch_out = jnp.arange(num_batches, dtype=jnp.int32)
    return pooled, pos_out, batch_out


def _reference(x, pos, batch, params, num_batches):
    w1, b1, w2, b2, w3, b3 = params
    h = jnp.concatenate([x, pos], axis=1)
    h = jnp.maximum(h @ w1 + b1, 0.0)
    h = jnp.maximum(h @ w2 + b2, 0.0)
    h = jnp.maximum(h @ w3 + b3, 0.0)
    out = jnp.full((num_batches, h.shape[1]), -jnp.inf, jnp.float32)
    out = out.at[batch].max(h)
    return out


if __name__ == "__main__":
    key = jax.random.PRNGKey(0)
    N, C_IN, B = 16, 4, 2
    H1, H2, C_OUT = 32, 32, 32
    D_IN = C_IN + 3

    k = jax.random.split(key, 8)
    x = jax.random.normal(k[0], (N, C_IN), jnp.float32)
    pos = jax.random.normal(k[1], (N, 3), jnp.float32)
    # every batch segment is guaranteed non-empty
    batch = jnp.concatenate(
        [jnp.zeros((N // 2,), jnp.int32), jnp.ones((N - N // 2,), jnp.int32)])

    def init_linear(kw, kb, fan_in, fan_out):
        scale = 1.0 / jnp.sqrt(jnp.float32(fan_in))
        w = jax.random.uniform(kw, (fan_in, fan_out), jnp.float32, -scale, scale)
        b = jax.random.uniform(kb, (1, fan_out), jnp.float32, -scale, scale)
        return w, b

    w1, b1 = init_linear(k[2], k[3], D_IN, H1)
    w2, b2 = init_linear(k[4], k[5], H1, H2)
    w3, b3 = init_linear(k[6], k[7], H2, C_OUT)
    params = (w1, b1, w2, b2, w3, b3)

    ref = _reference(x, pos, batch, params, B)

    # f32 path: exercises the N-tiling plus the 2-way parallel split.
    feat, pos_out, batch_out = global_sa_module(
        x, pos, batch, params, B, tile_n=8, num_splits=2)
    jax.block_until_ready((feat, pos_out, batch_out))
    assert feat.shape == (B, C_OUT)
    assert pos_out.shape == (B, 3)
    assert batch_out.shape == (B,)
    assert jnp.allclose(feat, ref, atol=1e-5, rtol=1e-5)

    # Single-tile path (tile covers all of N, no row mask, single split).
    feat_one, _, _ = global_sa_module(
        x, pos, batch, params, B, tile_n=1024, num_splits=1)
    jax.block_until_ready(feat_one)
    assert jnp.allclose(feat_one, ref, atol=1e-5, rtol=1e-5)

    # bf16 MXU path (native on v6e/v7x); looser tolerance for reduced precision.
    feat_bf16, _, _ = global_sa_module(
        x, pos, batch, params, B, tile_n=8, num_splits=2,
        compute_dtype=jnp.bfloat16)
    jax.block_until_ready(feat_bf16)
    assert jnp.allclose(feat_bf16, ref, atol=1e-1, rtol=1e-1)

    print("KERNEL_OK")
</pallas_src>

<mosaic_0001>
module attributes {stable_mosaic.version = 11 : i64} {
  func.func @_global_sa_kernel(%arg0: i32, %arg1: i32, %arg2: memref<8x4xf32, #tpu.memory_space<vmem>>, %arg3: memref<8x3xf32, #tpu.memory_space<vmem>>, %arg4: memref<8x1xi32, #tpu.memory_space<vmem>>, %arg5: memref<4x128xf32, #tpu.memory_space<vmem>>, %arg6: memref<3x128xf32, #tpu.memory_space<vmem>>, %arg7: memref<1x128xf32, #tpu.memory_space<vmem>>, %arg8: memref<128x128xf32, #tpu.memory_space<vmem>>, %arg9: memref<1x128xf32, #tpu.memory_space<vmem>>, %arg10: memref<128x128xf32, #tpu.memory_space<vmem>>, %arg11: memref<1x128xf32, #tpu.memory_space<vmem>>, %arg12: memref<1x2x128xf32, #tpu.memory_space<vmem>>) attributes {dimension_semantics = [#tpu.dimension_semantics<parallel>, #tpu.dimension_semantics<arbitrary>], iteration_bounds = array<i64: 2, 1>, scalar_prefetch = 0 : i64, scratch_operands = 0 : i64, tpu.core_type = #tpu.core_type<tc>, window_params = [{transform_indices = @transform_0, window_bounds = array<i64: 8, 4>}, {transform_indices = @transform_1, window_bounds = array<i64: 8, 3>}, {transform_indices = @transform_2, window_bounds = array<i64: 8, 1>}, {pipeline_mode = #tpu.pipeline_mode<synchronous>, transform_indices = @transform_3, window_bounds = array<i64: 4, 128>}, {pipeline_mode = #tpu.pipeline_mode<synchronous>, transform_indices = @transform_4, window_bounds = array<i64: 3, 128>}, {pipeline_mode = #tpu.pipeline_mode<synchronous>, transform_indices = @transform_5, window_bounds = array<i64: 1, 128>}, {pipeline_mode = #tpu.pipeline_mode<synchronous>, transform_indices = @transform_6, window_bounds = array<i64: 128, 128>}, {pipeline_mode = #tpu.pipeline_mode<synchronous>, transform_indices = @transform_7, window_bounds = array<i64: 1, 128>}, {pipeline_mode = #tpu.pipeline_mode<synchronous>, transform_indices = @transform_8, window_bounds = array<i64: 128, 128>}, {pipeline_mode = #tpu.pipeline_mode<synchronous>, transform_indices = @transform_9, window_bounds = array<i64: 1, 128>}, {transform_indices = @transform_10, window_bounds = array<i64: 1, 2, 128>}]} {
    %c0_i32 = arith.constant 0 : i32
    %0 = arith.cmpi eq, %arg1, %c0_i32 : i32
    %1 = arith.extui %0 : i1 to i32
    %c0_i32_0 = arith.constant 0 : i32
    %2 = arith.cmpi ne, %1, %c0_i32_0 : i32
    scf.if %2 {
      %cst_35 = arith.constant 0.000000e+00 : f32
      %51 = vector.broadcast %cst_35 : f32 to vector<1x2x128xf32>
      %c0_36 = arith.constant 0 : index
      %c0_37 = arith.constant 0 : index
      %c0_38 = arith.constant 0 : index
      %52 = vector.load %arg12[%c0_36, %c0_37, %c0_38] : memref<1x2x128xf32, #tpu.memory_space<vmem>>, vector<1x2x128xf32>
      tpu.vector_store %arg12[%c0_36, %c0_37, %c0_38], %51 {strides = array<i32>} : memref<1x2x128xf32, #tpu.memory_space<vmem>>, vector<1x2x128xf32>,
    } else {
    }
    %c0 = arith.constant 0 : index
    %c0_1 = arith.constant 0 : index
    %3 = vector.load %arg2[%c0, %c0_1] : memref<8x4xf32, #tpu.memory_space<vmem>>, vector<8x4xf32>
    %c0_2 = arith.constant 0 : index
    %c0_3 = arith.constant 0 : index
    %4 = vector.load %arg3[%c0_2, %c0_3] : memref<8x3xf32, #tpu.memory_space<vmem>>, vector<8x3xf32>
    %c0_4 = arith.constant 0 : index
    %c0_5 = arith.constant 0 : index
    %5 = vector.load %arg4[%c0_4, %c0_5] : memref<8x1xi32, #tpu.memory_space<vmem>>, vector<8x1xi32>
    %c0_6 = arith.constant 0 : index
    %c0_7 = arith.constant 0 : index
    %6 = vector.load %arg5[%c0_6, %c0_7] : memref<4x128xf32, #tpu.memory_space<vmem>>, vector<4x128xf32>
    %cst = arith.constant dense<0.000000e+00> : vector<8x128xf32>
    %7 = tpu.matmul %3, %6, %cst {dimension_numbers = #tpu.dot_dimension_numbers<[1], [0], [0], [1], [0, 0, 1, 1], [], []>} : vector<8x4xf32>, vector<4x128xf32>, vector<8x128xf32> -> vector<8x128xf32>
    %c0_8 = arith.constant 0 : index
    %c0_9 = arith.constant 0 : index
    %8 = vector.load %arg6[%c0_8, %c0_9] : memref<3x128xf32, #tpu.memory_space<vmem>>, vector<3x128xf32>
    %cst_10 = arith.constant dense<0.000000e+00> : vector<8x128xf32>
    %9 = tpu.matmul %4, %8, %cst_10 {dimension_numbers = #tpu.dot_dimension_numbers<[1], [0], [0], [1], [0, 0, 1, 1], [], []>} : vector<8x3xf32>, vector<3x128xf32>, vector<8x128xf32> -> vector<8x128xf32>
    %10 = arith.addf %7, %9 : vector<8x128xf32>
    %c0_11 = arith.constant 0 : index
    %c0_12 = arith.constant 0 : index
    %11 = vector.load %arg7[%c0_11, %c0_12] : memref<1x128xf32, #tpu.memory_space<vmem>>, vector<1x128xf32>
    %12 = vector.broadcast %11 : vector<1x128xf32> to vector<8x128xf32>
    %13 = arith.addf %10, %12 : vector<8x128xf32>
    %cst_13 = arith.constant 0.000000e+00 : f32
    %14 = vector.broadcast %cst_13 : f32 to vector<8x128xf32>
    %15 = arith.maximumf %13, %14 : vector<8x128xf32>
    %c0_14 = arith.constant 0 : index
    %c0_15 = arith.constant 0 : index
    %16 = vector.load %arg8[%c0_14, %c0_15] : memref<128x128xf32, #tpu.memory_space<vmem>>, vector<128x128xf32>
    %cst_16 = arith.constant dense<0.000000e+00> : vector<8x128xf32>
    %17 = tpu.matmul %15, %16, %cst_16 {dimension_numbers = #tpu.dot_dimension_numbers<[1], [0], [0], [1], [0, 0, 1, 1], [], []>} : vector<8x128xf32>, vector<128x128xf32>, vector<8x128xf32> -> vector<8x128xf32>
    %c0_17 = arith.constant 0 : index
    %c0_18 = arith.constant 0 : index
    %18 = vector.load %arg9[%c0_17, %c0_18] : memref<1x128xf32, #tpu.memory_space<vmem>>, vector<1x128xf32>
    %19 = vector.broadcast %18 : vector<1x128xf32> to vector<8x128xf32>
    %20 = arith.addf %17, %19 : vector<8x128xf32>
    %cst_19 = arith.constant 0.000000e+00 : f32
    %21 = vector.broadcast %cst_19 : f32 to vector<8x128xf32>
    %22 = arith.maximumf %20, %21 : vector<8x128xf32>
    %c0_20 = arith.constant 0 : index
    %c0_21 = arith.constant 0 : index
    %23 = vector.load %arg10[%c0_20, %c0_21] : memref<128x128xf32, #tpu.memory_space<vmem>>, vector<128x128xf32>
    %cst_22 = arith.constant dense<0.000000e+00> : vector<8x128xf32>
    %24 = tpu.matmul %22, %23, %cst_22 {dimension_numbers = #tpu.dot_dimension_numbers<[1], [0], [0], [1], [0, 0, 1, 1], [], []>} : vector<8x128xf32>, vector<128x128xf32>, vector<8x128xf32> -> vector<8x128xf32>
    %c0_23 = arith.constant 0 : index
    %c0_24 = arith.constant 0 : index
    %25 = vector.load %arg11[%c0_23, %c0_24] : memref<1x128xf32, #tpu.memory_space<vmem>>, vector<1x128xf32>
    %26 = vector.broadcast %25 : vector<1x128xf32> to vector<8x128xf32>
    %27 = arith.addf %24, %26 : vector<8x128xf32>
    %cst_25 = arith.constant 0.000000e+00 : f32
    %28 = vector.broadcast %cst_25 : f32 to vector<8x128xf32>
    %29 = arith.maximumf %27, %28 : vector<8x128xf32>
    %c0_i32_26 = arith.constant 0 : i32
    %30 = vector.broadcast %c0_i32_26 : i32 to vector<8x1xi32>
    %31 = arith.cmpi eq, %5, %30 : vector<8x1xi32>
    %32 = arith.extui %31 : vector<8x1xi1> to vector<8x1xi32>
    %33 = arith.sitofp %32 : vector<8x1xi32> to vector<8x1xf32>
    %34 = vector.broadcast %33 : vector<8x1xf32> to vector<8x128xf32>
    %35 = arith.mulf %29, %34 : vector<8x128xf32>
    %cst_27 = arith.constant dense<0xFF800000> : vector<128xf32>
    %36 = vector.multi_reduction <maximumf>, %35, %cst_27 [0] : vector<8x128xf32> to vector<128xf32>
    %37 = vector.shape_cast %36 : vector<128xf32> to vector<1x128xf32>
    %c1_i32 = arith.constant 1 : i32
    %38 = vector.broadcast %c1_i32 : i32 to vector<8x1xi32>
    %39 = arith.cmpi eq, %5, %38 : vector<8x1xi32>
    %40 = arith.extui %39 : vector<8x1xi1> to vector<8x1xi32>
    %41 = arith.sitofp %40 : vector<8x1xi32> to vector<8x1xf32>
    %42 = vector.broadcast %41 : vector<8x1xf32> to vector<8x128xf32>
    %43 = arith.mulf %29, %42 : vector<8x128xf32>
    %cst_28 = arith.constant dense<0xFF800000> : vector<128xf32>
    %44 = vector.multi_reduction <maximumf>, %43, %cst_28 [0] : vector<8x128xf32> to vector<128xf32>
    %45 = vector.shape_cast %44 : vector<128xf32> to vector<1x128xf32>
    %46 = tpu.concatenate %37, %45 in 0 : vector<1x128xf32>, vector<1x128xf32> -> vector<2x128xf32>
    %c0_29 = arith.constant 0 : index
    %c0_30 = arith.constant 0 : index
    %c0_31 = arith.constant 0 : index
    %47 = vector.load %arg12[%c0_29, %c0_30, %c0_31] : memref<1x2x128xf32, #tpu.memory_space<vmem>>, vector<1x2x128xf32>
    %48 = vector.shape_cast %46 : vector<2x128xf32> to vector<1x2x128xf32>
    %49 = arith.maximumf %47, %48 : vector<1x2x128xf32>
    %c0_32 = arith.constant 0 : index
    %c0_33 = arith.constant 0 : index
    %c0_34 = arith.constant 0 : index
    %50 = vector.load %arg12[%c0_32, %c0_33, %c0_34] : memref<1x2x128xf32, #tpu.memory_space<vmem>>, vector<1x2x128xf32>
    tpu.vector_store %arg12[%c0_32, %c0_33, %c0_34], %49 {strides = array<i32>} : memref<1x2x128xf32, #tpu.memory_space<vmem>>, vector<1x2x128xf32>,
    return
  }
  func.func @transform_0(%arg0: i32, %arg1: i32) -> (i32, i32) {
    %c1_i32 = arith.constant 1 : i32
    %0 = arith.muli %arg0, %c1_i32 : i32
    %1 = arith.addi %0, %arg1 : i32
    %c0_i32 = arith.constant 0 : i32
    %c0_i32_0 = arith.constant 0 : i32
    return %1, %c0_i32 : i32, i32
  }
  func.func @transform_1(%arg0: i32, %arg1: i32) -> (i32, i32) {
    %c1_i32 = arith.constant 1 : i32
    %0 = arith.muli %arg0, %c1_i32 : i32
    %1 = arith.addi %0, %arg1 : i32
    %c0_i32 = arith.constant 0 : i32
    %c0_i32_0 = arith.constant 0 : i32
    return %1, %c0_i32 : i32, i32
  }
  func.func @transform_2(%arg0: i32, %arg1: i32) -> (i32, i32) {
    %c1_i32 = arith.constant 1 : i32
    %0 = arith.muli %arg0, %c1_i32 : i32
    %1 = arith.addi %0, %arg1 : i32
    %c0_i32 = arith.constant 0 : i32
    %c0_i32_0 = arith.constant 0 : i32
    return %1, %c0_i32 : i32, i32
  }
  func.func @transform_3(%arg0: i32, %arg1: i32) -> (i32, i32) {
    %c0_i32 = arith.constant 0 : i32
    %c0_i32_0 = arith.constant 0 : i32
    %c0_i32_1 = arith.constant 0 : i32
    return %c0_i32, %c0_i32_0 : i32, i32
  }
  func.func @transform_4(%arg0: i32, %arg1: i32) -> (i32, i32) {
    %c0_i32 = arith.constant 0 : i32
    %c0_i32_0 = arith.constant 0 : i32
    %c0_i32_1 = arith.constant 0 : i32
    return %c0_i32, %c0_i32_0 : i32, i32
  }
  func.func @transform_5(%arg0: i32, %arg1: i32) -> (i32, i32) {
    %c0_i32 = arith.constant 0 : i32
    %c0_i32_0 = arith.constant 0 : i32
    %c0_i32_1 = arith.constant 0 : i32
    return %c0_i32, %c0_i32_0 : i32, i32
  }
  func.func @transform_6(%arg0: i32, %arg1: i32) -> (i32, i32) {
    %c0_i32 = arith.constant 0 : i32
    %c0_i32_0 = arith.constant 0 : i32
    %c0_i32_1 = arith.constant 0 : i32
    return %c0_i32, %c0_i32_0 : i32, i32
  }
  func.func @transform_7(%arg0: i32, %arg1: i32) -> (i32, i32) {
    %c0_i32 = arith.constant 0 : i32
    %c0_i32_0 = arith.constant 0 : i32
    %c0_i32_1 = arith.constant 0 : i32
    return %c0_i32, %c0_i32_0 : i32, i32
  }
  func.func @transform_8(%arg0: i32, %arg1: i32) -> (i32, i32) {
    %c0_i32 = arith.constant 0 : i32
    %c0_i32_0 = arith.constant 0 : i32
    %c0_i32_1 = arith.constant 0 : i32
    return %c0_i32, %c0_i32_0 : i32, i32
  }
  func.func @transform_9(%arg0: i32, %arg1: i32) -> (i32, i32) {
    %c0_i32 = arith.constant 0 : i32
    %c0_i32_0 = arith.constant 0 : i32
    %c0_i32_1 = arith.constant 0 : i32
    return %c0_i32, %c0_i32_0 : i32, i32
  }
  func.func @transform_10(%arg0: i32, %arg1: i32) -> (i32, i32, i32) {
    %c0_i32 = arith.constant 0 : i32
    %c0_i32_0 = arith.constant 0 : i32
    %c0_i32_1 = arith.constant 0 : i32
    return %arg0, %c0_i32, %c0_i32_0 : i32, i32, i32
  }
}

</mosaic_0001>

<llo_original>
// kernel: tpu_custom_call.1
$region0: #{tpu_custom_call.1}
  #allocation0 [shape = 'u32[]', space=smem, size = 0x4, offset = 0x4, fixed_abs, tag = 'smem constant byte address 0x4 - core index']
  #allocation1 [shape = 'u32[72,128]{1,0:T(1,128)}', space=vmem, size = 0x9000, scoped, tag = 'internal scratch']
  %s0 = inlined_call_operand.vmem [shape: f32[16,4], index: 0, kind: input, shape index: {}]
  %s1 = inlined_call_operand.vmem [shape: f32[16,3], index: 1, kind: input, shape index: {}]
  %s2 = inlined_call_operand.vmem [shape: s32[16,1], index: 2, kind: input, shape index: {}]
  %s3 = inlined_call_operand.vmem [shape: f32[4,128], index: 3, kind: input, shape index: {}]
  %s4 = inlined_call_operand.vmem [shape: f32[3,128], index: 4, kind: input, shape index: {}]
  %s5 = inlined_call_operand.vmem [shape: f32[1,128], index: 5, kind: input, shape index: {}]
  %s6 = inlined_call_operand.hbm [shape: f32[128,128], index: 6, kind: input, shape index: {}]
  %s7 = inlined_call_operand.vmem [shape: f32[1,128], index: 7, kind: input, shape index: {}]
  %s8 = inlined_call_operand.hbm [shape: f32[128,128], index: 8, kind: input, shape index: {}]
  %s9 = inlined_call_operand.vmem [shape: f32[1,128], index: 9, kind: input, shape index: {}]
  %s10 = inlined_call_operand.hbm [shape: f32[2,2,128], index: 10, kind: output, shape index: {}]
  %s11 = sld [smem:[#allocation0]]
  $region85: #{tpu_custom_call.1} parent=0
    _
  %s13 = ssub.s32 1, %s11
  %s14 = scalar_select 0, %s13, %s11
  $region1: #{tpu_custom_call.1} parent=0
    #allocation2 [shape = 'u8[65536]{0}', space=vmem, size = 0x10000, scoped, tag = 'input window, operand 6, single buffered']
    #allocation3 [shape = 's32[2]{0}', space=sflag, size = 0x8, scoped, tag = 'scoped memory for tpu_custom_call.1']
    #allocation4 [shape = 's32[2]{0}', space=sflag, size = 0x8, scoped, tag = 'scoped memory for tpu_custom_call.1']
    #allocation5 [shape = 'u8[65536]{0}', space=vmem, size = 0x10000, scoped, tag = 'input window, operand 8, single buffered']
    #allocation6 [shape = 's32[1]{0}', space=sflag, size = 0x4, scoped, tag = 'scoped memory for tpu_custom_call.1']
    #allocation7 [shape = 'u8[2048]{0}', space=vmem, size = 0x800, scoped, tag = 'output window, operand 0']
    %15 = vsyncpa [#allocation3], 0
    %16 = vsyncpa [#allocation6], 0
    %17 = vsyncpa [#allocation4], 0
    %s18 = scalar_lea.sflag [#allocation4], 1
    %19 = vsyncpa %s18, 0
    loop: start=0, step=1, limit=4
    $region2: #{tpu_custom_call.1} parent=1 // loop_pre_header
      _
    $region3: #{tpu_custom_call.1} parent=1 // loop_header
      %s21 = sphi 0, %s25
      %p22 = scmp.ge.s32.totalorder %s21, 4
      %s28 = sphi 0, %s40
      %s29 = sphi 0, %s36
      %s30 = sphi 0, %s28
      %s31 = sphi 0, %s29
      %s32 = sphi 0, %s30
      %s33 = sphi 0, %s31
      %s45 = sphi 0, %s47
      %s48 = sphi 0, %s45
      %s49 = sphi 0, %s48
      %s65 = sphi 0, %s49
      %s73 = sphi 0, %s75
      %s76 = sphi 0, %s73
      %s77 = sphi 0, %s76
      %s93 = sphi 0, %s77
      %s101 = sphi 0, %s103
      %s104 = sphi 0, %s101
      %s105 = sphi 0, %s104
      %s121 = sphi 0, %s105
      %s125 = sphi 0, %s125
      %s127 = sphi 0, %s125
      %s128 = sphi 0, %s127
      %s142 = sphi 0, %s128
      %s146 = sphi 0, %s146
      %s148 = sphi 0, %s146
      %s149 = sphi 0, %s148
      %s163 = sphi 0, %s149
      %s167 = sphi 0, %s167
      %s169 = sphi 0, %s167
      %s170 = sphi 0, %s169
      %s184 = sphi 0, %s170
      %s188 = sphi 0, %s188
      %s190 = sphi 0, %s188
      %s191 = sphi 0, %s190
      %s205 = sphi 0, %s191
      %s209 = sphi 0, %s209
      %s211 = sphi 0, %s209
      %s212 = sphi 0, %s211
      %s226 = sphi 0, %s212
      %s230 = sphi 0, %s230
      %s232 = sphi 0, %s230
      %s233 = sphi 0, %s232
      %s247 = sphi 0, %s233
      %s251 = sphi 0, %s251
      %s253 = sphi 0, %s251
      %s254 = sphi 0, %s253
      %s268 = sphi 0, %s254
      %s274 = sphi 0, %s276
      %s277 = sphi 0, %s274
      %s278 = sphi 0, %s277
      %s294 = sphi 0, %s278
    $region4: #{tpu_custom_call.1} parent=1 // loop_header_branch
      %24 = sbr.rel (%p22) target = $region8
    $region5: #{tpu_custom_call.1} parent=1 // loop_body
      %s26 = ssub.s32 %s21, 1
      %s27 = ssub.s32 %s21, 2
      %s34 = sadd.s32 1, %s29
      %p35 = scmp.ge.s32.totalorder %s34, 1
      %s36 = scalar_select %p35, 0, %s34
      %s37 = sadd.s32 1, %s28
      %s38 = scalar_select %p35, %s37, %s28
      %p39 = scmp.ge.s32.totalorder %s38, 2
      %s40 = scalar_select %p39, 0, %s38
      %s41 = sadd.s32 %s28, %s29
      %s42 = sadd.s32 %s40, %s36
      %s43 = ssub.s32 %s41, %s42
      %p44 = scmp.eq.s32.totalorder %s43, 0
      %s46 = sadd.s32 %s45, 1
      %s47 = scalar_select %p44, %s45, %s46
      %p50 = pneg %p44
      %p51 = scmp.eq.s32.totalorder %s21, 1
      %p52 = por %p50, %p51
      %p53 = scmp.ne.s32.totalorder %s45, %s48
      %p54 = scmp.eq.s32.totalorder %s21, 0
      %p55 = por %p53, %p54
      %p56 = scmp.ne.s32.totalorder %s45, %s48
      %p57 = scmp.eq.s32.totalorder %s26, 1
      %p58 = por %p56, %p57
      %p59 = scmp.ne.s32.totalorder %s48, %s49
      %p60 = scmp.eq.s32.totalorder %s26, 0
      %p61 = por %p59, %p60
      %p62 = scmp.ne.s32.totalorder %s48, %s49
      %p63 = scmp.eq.s32.totalorder %s27, 1
      %p64 = por %p62, %p63
      %p66 = scmp.ne.s32.totalorder %s49, %s65
      %p67 = scmp.eq.s32.totalorder %s27, 0
      %p68 = por %p66, %p67
      %s69 = sadd.s32 %s28, %s29
      %s70 = sadd.s32 %s40, %s36
      %s71 = ssub.s32 %s69, %s70
      %p72 = scmp.eq.s32.totalorder %s71, 0
      %s74 = sadd.s32 %s73, 1
      %s75 = scalar_select %p72, %s73, %s74
      %p78 = pneg %p72
      %p79 = scmp.eq.s32.totalorder %s21, 1
      %p80 = por %p78, %p79
      %p81 = scmp.ne.s32.totalorder %s73, %s76
      %p82 = scmp.eq.s32.totalorder %s21, 0
      %p83 = por %p81, %p82
      %p84 = scmp.ne.s32.totalorder %s73, %s76
      %p85 = scmp.eq.s32.totalorder %s26, 1
      %p86 = por %p84, %p85
      %p87 = scmp.ne.s32.totalorder %s76, %s77
      %p88 = scmp.eq.s32.totalorder %s26, 0
      %p89 = por %p87, %p88
      %p90 = scmp.ne.s32.totalorder %s76, %s77
      %p91 = scmp.eq.s32.totalorder %s27, 1
      %p92 = por %p90, %p91
      %p94 = scmp.ne.s32.totalorder %s77, %s93
      %p95 = scmp.eq.s32.totalorder %s27, 0
      %p96 = por %p94, %p95
      %s97 = sadd.s32 %s28, %s29
      %s98 = sadd.s32 %s40, %s36
      %s99 = ssub.s32 %s97, %s98
      %p100 = scmp.eq.s32.totalorder %s99, 0
      %s102 = sadd.s32 %s101, 1
      %s103 = scalar_select %p100, %s101, %s102
      %p106 = pneg %p100
      %p107 = scmp.eq.s32.totalorder %s21, 1
      %p108 = por %p106, %p107
      %p109 = scmp.ne.s32.totalorder %s101, %s104
      %p110 = scmp.eq.s32.totalorder %s21, 0
      %p111 = por %p109, %p110
      %p112 = scmp.ne.s32.totalorder %s101, %s104
      %p113 = scmp.eq.s32.totalorder %s26, 1
      %p114 = por %p112, %p113
      %p115 = scmp.ne.s32.totalorder %s104, %s105
      %p116 = scmp.eq.s32.totalorder %s26, 0
      %p117 = por %p115, %p116
      %p118 = scmp.ne.s32.totalorder %s104, %s105
      %p119 = scmp.eq.s32.totalorder %s27, 1
      %p120 = por %p118, %p119
      %p122 = scmp.ne.s32.totalorder %s105, %s121
      %p123 = scmp.eq.s32.totalorder %s27, 0
      %p124 = por %p122, %p123
      %s126 = sadd.s32 %s125, 1
      %p129 = scmp.eq.s32.totalorder %s21, 1
      %p130 = scmp.ne.s32.totalorder %s125, %s127
      %p131 = scmp.eq.s32.totalorder %s21, 0
      %p132 = por %p130, %p131
      %p133 = scmp.ne.s32.totalorder %s125, %s127
      %p134 = scmp.eq.s32.totalorder %s26, 1
      %p135 = por %p133, %p134
      %p136 = scmp.ne.s32.totalorder %s127, %s128
      %p137 = scmp.eq.s32.totalorder %s26, 0
      %p138 = por %p136, %p137
      %p139 = scmp.ne.s32.totalorder %s127, %s128
      %p140 = scmp.eq.s32.totalorder %s27, 1
      %p141 = por %p139, %p140
      %p143 = scmp.ne.s32.totalorder %s128, %s142
      %p144 = scmp.eq.s32.totalorder %s27, 0
      %p145 = por %p143, %p144
      %s147 = sadd.s32 %s146, 1
      %p150 = scmp.eq.s32.totalorder %s21, 1
      %p151 = scmp.ne.s32.totalorder %s146, %s148
      %p152 = scmp.eq.s32.totalorder %s21, 0
      %p153 = por %p151, %p152
      %p154 = scmp.ne.s32.totalorder %s146, %s148
      %p155 = scmp.eq.s32.totalorder %s26, 1
      %p156 = por %p154, %p155
      %p157 = scmp.ne.s32.totalorder %s148, %s149
      %p158 = scmp.eq.s32.totalorder %s26, 0
      %p159 = por %p157, %p158
      %p160 = scmp.ne.s32.totalorder %s148, %s149
      %p161 = scmp.eq.s32.totalorder %s27, 1
      %p162 = por %p160, %p161
      %p164 = scmp.ne.s32.totalorder %s149, %s163
      %p165 = scmp.eq.s32.totalorder %s27, 0
      %p166 = por %p164, %p165
      %s168 = sadd.s32 %s167, 1
      %p171 = scmp.eq.s32.totalorder %s21, 1
      %p172 = scmp.ne.s32.totalorder %s167, %s169
      %p173 = scmp.eq.s32.totalorder %s21, 0
      %p174 = por %p172, %p173
      %p175 = scmp.ne.s32.totalorder %s167, %s169
      %p176 = scmp.eq.s32.totalorder %s26, 1
      %p177 = por %p175, %p176
      %p178 = scmp.ne.s32.totalorder %s169, %s170
      %p179 = scmp.eq.s32.totalorder %s26, 0
      %p180 = por %p178, %p179
      %p181 = scmp.ne.s32.totalorder %s169, %s170
      %p182 = scmp.eq.s32.totalorder %s27, 1
      %p183 = por %p181, %p182
      %p185 = scmp.ne.s32.totalorder %s170, %s184
      %p186 = scmp.eq.s32.totalorder %s27, 0
      %p187 = por %p185, %p186
      %s189 = sadd.s32 %s188, 1
      %p192 = scmp.eq.s32.totalorder %s21, 1
      %p193 = scmp.ne.s32.totalorder %s188, %s190
      %p194 = scmp.eq.s32.totalorder %s21, 0
      %p195 = por %p193, %p194
      %p196 = scmp.ne.s32.totalorder %s188, %s190
      %p197 = scmp.eq.s32.totalorder %s26, 1
      %p198 = por %p196, %p197
      %p199 = scmp.ne.s32.totalorder %s190, %s191
      %p200 = scmp.eq.s32.totalorder %s26, 0
      %p201 = por %p199, %p200
      %p202 = scmp.ne.s32.totalorder %s190, %s191
      %p203 = scmp.eq.s32.totalorder %s27, 1
      %p204 = por %p202, %p203
      %p206 = scmp.ne.s32.totalorder %s191, %s205
      %p207 = scmp.eq.s32.totalorder %s27, 0
      %p208 = por %p206, %p207
      %s210 = sadd.s32 %s209, 1
      %p213 = scmp.eq.s32.totalorder %s21, 1
      %p214 = scmp.ne.s32.totalorder %s209, %s211
      %p215 = scmp.eq.s32.totalorder %s21, 0
      %p216 = por %p214, %p215
      %p217 = scmp.ne.s32.totalorder %s209, %s211
      %p218 = scmp.eq.s32.totalorder %s26, 1
      %p219 = por %p217, %p218
      %p220 = scmp.ne.s32.totalorder %s211, %s212
      %p221 = scmp.eq.s32.totalorder %s26, 0
      %p222 = por %p220, %p221
      %p223 = scmp.ne.s32.totalorder %s211, %s212
      %p224 = scmp.eq.s32.totalorder %s27, 1
      %p225 = por %p223, %p224
      %p227 = scmp.ne.s32.totalorder %s212, %s226
      %p228 = scmp.eq.s32.totalorder %s27, 0
      %p229 = por %p227, %p228
      %s231 = sadd.s32 %s230, 1
      %p234 = scmp.eq.s32.totalorder %s21, 1
      %p235 = scmp.ne.s32.totalorder %s230, %s232
      %p236 = scmp.eq.s32.totalorder %s21, 0
      %p237 = por %p235, %p236
      %p238 = scmp.ne.s32.totalorder %s230, %s232
      %p239 = scmp.eq.s32.totalorder %s26, 1
      %p240 = por %p238, %p239
      %p241 = scmp.ne.s32.totalorder %s232, %s233
      %p242 = scmp.eq.s32.totalorder %s26, 0
      %p243 = por %p241, %p242
      %p244 = scmp.ne.s32.totalorder %s232, %s233
      %p245 = scmp.eq.s32.totalorder %s27, 1
      %p246 = por %p244, %p245
      %p248 = scmp.ne.s32.totalorder %s233, %s247
      %p249 = scmp.eq.s32.totalorder %s27, 0
      %p250 = por %p248, %p249
      %s252 = sadd.s32 %s251, 1
      %p255 = scmp.eq.s32.totalorder %s21, 1
      %p256 = scmp.ne.s32.totalorder %s251, %s253
      %p257 = scmp.eq.s32.totalorder %s21, 0
      %p258 = por %p256, %p257
      %p259 = scmp.ne.s32.totalorder %s251, %s253
      %p260 = scmp.eq.s32.totalorder %s26, 1
      %p261 = por %p259, %p260
      %p262 = scmp.ne.s32.totalorder %s253, %s254
      %p263 = scmp.eq.s32.totalorder %s26, 0
      %p264 = por %p262, %p263
      %p265 = scmp.ne.s32.totalorder %s253, %s254
      %p266 = scmp.eq.s32.totalorder %s27, 1
      %p267 = por %p265, %p266
      %p269 = scmp.ne.s32.totalorder %s254, %s268
      %p270 = scmp.eq.s32.totalorder %s27, 0
      %p271 = por %p269, %p270
      %s272 = ssub.s32 %s28, %s40
      %p273 = scmp.eq.s32.totalorder %s272, 0
      %s275 = sadd.s32 %s274, 1
      %s276 = scalar_select %p273, %s274, %s275
      %p279 = pneg %p273
      %p280 = scmp.eq.s32.totalorder %s21, 1
      %p281 = por %p279, %p280
      %p282 = scmp.ne.s32.totalorder %s274, %s277
      %p283 = scmp.eq.s32.totalorder %s21, 0
      %p284 = por %p282, %p283
      %p285 = scmp.ne.s32.totalorder %s274, %s277
      %p286 = scmp.eq.s32.totalorder %s26, 1
      %p287 = por %p285, %p286
      %p288 = scmp.ne.s32.totalorder %s277, %s278
      %p289 = scmp.eq.s32.totalorder %s26, 0
      %p290 = por %p288, %p289
      %p291 = scmp.ne.s32.totalorder %s277, %s278
      %p292 = scmp.eq.s32.totalorder %s27, 1
      %p293 = por %p291, %p292
      %p295 = scmp.ne.s32.totalorder %s278, %s294
      %p296 = scmp.eq.s32.totalorder %s27, 0
      %p297 = por %p295, %p296
      %p298 = scmp.le.s32.totalorder 1, %s21
      %p299 = scmp.lt.s32.totalorder %s21, 3
      %p300 = pnand %p298, %p299
      %p301 = pneg %p300
      // Predicated region
      $region9: #{tpu_custom_call.1} parent=5 // pred_check
        _
      $region10: #{tpu_custom_call.1} parent=5 // pred_check_branch
        %303 = sbr.rel (%p300) target = $region12
      $region11: #{tpu_custom_call.1} parent=5 // pred_region
        %s304 = ssub.s32 %s21, 1
        // Predicated region
        $region13: #{tpu_custom_call.1} parent=11 // pred_check
          %p305 = pneg %p138
        $region14: #{tpu_custom_call.1} parent=11 // pred_check_branch
          %307 = sbr.rel (%p305) target = $region16
        $region15: #{tpu_custom_call.1} parent=11 // pred_region
          _
        $region16: #{tpu_custom_call.1} parent=11 // pred_fallthru
          _
        // Predicated region
        $region17: #{tpu_custom_call.1} parent=11 // pred_check
          %p308 = pneg %p159
        $region18: #{tpu_custom_call.1} parent=11 // pred_check_branch
          %310 = sbr.rel (%p308) target = $region20
        $region19: #{tpu_custom_call.1} parent=11 // pred_region
          _
        $region20: #{tpu_custom_call.1} parent=11 // pred_fallthru
          _
        // Predicated region
        $region21: #{tpu_custom_call.1} parent=11 // pred_check
          %p311 = pneg %p180
        $region22: #{tpu_custom_call.1} parent=11 // pred_check_branch
          %313 = sbr.rel (%p311) target = $region24
        $region23: #{tpu_custom_call.1} parent=11 // pred_region
          _
        $region24: #{tpu_custom_call.1} parent=11 // pred_fallthru
          _
        // Predicated region
        $region25: #{tpu_custom_call.1} parent=11 // pred_check
          %p314 = pneg %p201
        $region26: #{tpu_custom_call.1} parent=11 // pred_check_branch
          %316 = sbr.rel (%p314) target = $region28
        $region27: #{tpu_custom_call.1} parent=11 // pred_region
          %318 = vsyncadd [#allocation3], 0
          %s319 = sshll.u32 %s6, 4
          %s320 = int_to_ptr.hbm [resolvable:$true] %s319
          %s321 = sshll.u32 [#allocation2], 4
          %s322 = int_to_ptr.vmem [resolvable:$true] %s321
          %327 = dma.hbm_to_vmem [thread:$0]  %s320, 2048, %s322, [#allocation3], 128, 128, 8
        $region28: #{tpu_custom_call.1} parent=11 // pred_fallthru
          _
        // Predicated region
        $region29: #{tpu_custom_call.1} parent=11 // pred_check
          %p328 = pneg %p222
        $region30: #{tpu_custom_call.1} parent=11 // pred_check_branch
          %330 = sbr.rel (%p328) target = $region32
        $region31: #{tpu_custom_call.1} parent=11 // pred_region
          _
        $region32: #{tpu_custom_call.1} parent=11 // pred_fallthru
          _
        // Predicated region
        $region33: #{tpu_custom_call.1} parent=11 // pred_check
          %p331 = pneg %p243
        $region34: #{tpu_custom_call.1} parent=11 // pred_check_branch
          %333 = sbr.rel (%p331) target = $region36
        $region35: #{tpu_custom_call.1} parent=11 // pred_region
          %335 = vsyncadd [#allocation6], 0
          %s336 = sshll.u32 %s8, 4
          %s337 = int_to_ptr.hbm [resolvable:$true] %s336
          %s338 = sshll.u32 [#allocation5], 4
          %s339 = int_to_ptr.vmem [resolvable:$true] %s338
          %344 = dma.hbm_to_vmem [thread:$0]  %s337, 2048, %s339, [#allocation6], 128, 128, 8
        $region36: #{tpu_custom_call.1} parent=11 // pred_fallthru
          _
        // Predicated region
        $region37: #{tpu_custom_call.1} parent=11 // pred_check
          %p345 = pneg %p264
        $region38: #{tpu_custom_call.1} parent=11 // pred_check_branch
          %347 = sbr.rel (%p345) target = $region40
        $region39: #{tpu_custom_call.1} parent=11 // pred_region
          _
        $region40: #{tpu_custom_call.1} parent=11 // pred_fallthru
          _
      $region12: #{tpu_custom_call.1} parent=5 // pred_fallthru
        _
      %p348 = scmp.lt.s32.totalorder %s21, 2
      // Predicated region
      $region41: #{tpu_custom_call.1} parent=5 // pred_check
        %p349 = pneg %p348
      $region42: #{tpu_custom_call.1} parent=5 // pred_check_branch
        %351 = sbr.rel (%p349) target = $region44
      $region43: #{tpu_custom_call.1} parent=5 // pred_region
        // Predicated region
        $region45: #{tpu_custom_call.1} parent=43 // pred_check
          %p352 = pneg %p55
        $region46: #{tpu_custom_call.1} parent=43 // pred_check_branch
          %354 = sbr.rel (%p352) target = $region48
        $region47: #{tpu_custom_call.1} parent=43 // pred_region
          %s355 = sadd.s32 %s28, %s29
          %p356 = scmp.lt.s32.totalorder %s355, 1
          %s357 = scalar_select %p356, %s355, 1
          %s358 = smul.addr %s357, 8
          %s359 = scalar_lea.vmem %s0, %s358
          %s360 = sadd.s32 %s28, %s29
        $region48: #{tpu_custom_call.1} parent=43 // pred_fallthru
          _
        // Predicated region
        $region49: #{tpu_custom_call.1} parent=43 // pred_check
          %p361 = pneg %p83
        $region50: #{tpu_custom_call.1} parent=43 // pred_check_branch
          %363 = sbr.rel (%p361) target = $region52
        $region51: #{tpu_custom_call.1} parent=43 // pred_region
          %s364 = sadd.s32 %s28, %s29
          %p365 = scmp.lt.s32.totalorder %s364, 1
          %s366 = scalar_select %p365, %s364, 1
          %s367 = smul.addr %s366, 8
          %s368 = scalar_lea.vmem %s1, %s367
          %s369 = sadd.s32 %s28, %s29
        $region52: #{tpu_custom_call.1} parent=43 // pred_fallthru
          _
        // Predicated region
        $region53: #{tpu_custom_call.1} parent=43 // pred_check
          %p370 = pneg %p111
        $region54: #{tpu_custom_call.1} parent=43 // pred_check_branch
          %372 = sbr.rel (%p370) target = $region56
        $region55: #{tpu_custom_call.1} parent=43 // pred_region
          %s373 = sadd.s32 %s28, %s29
          %p374 = scmp.lt.s32.totalorder %s373, 1
          %s375 = scalar_select %p374, %s373, 1
          %s376 = smul.addr %s375, 8
          %s377 = scalar_lea.vmem %s2, %s376
          %s378 = sadd.s32 %s28, %s29
        $region56: #{tpu_custom_call.1} parent=43 // pred_fallthru
          _
      $region44: #{tpu_custom_call.1} parent=5 // pred_fallthru
        _
      %p379 = scmp.le.s32.totalorder 1, %s21
      %p380 = scmp.lt.s32.totalorder %s21, 3
      %p381 = pnand %p379, %p380
      %p382 = pneg %p381
      // Predicated region
      $region57: #{tpu_custom_call.1} parent=5 // pred_check
        _
      $region58: #{tpu_custom_call.1} parent=5 // pred_check_branch
        %384 = sbr.rel (%p381) target = $region60
      $region59: #{tpu_custom_call.1} parent=5 // pred_region
        %s385 = ssub.s32 %s21, 1
        // Predicated region
        $region61: #{tpu_custom_call.1} parent=59 // pred_check
          %p386 = pneg %p201
        $region62: #{tpu_custom_call.1} parent=59 // pred_check_branch
          %388 = sbr.rel (%p386) target = $region64
        $region63: #{tpu_custom_call.1} parent=59 // pred_region
          %390 = dma.done [#allocation3], 2048
        $region64: #{tpu_custom_call.1} parent=59 // pred_fallthru
          _
        // Predicated region
        $region65: #{tpu_custom_call.1} parent=59 // pred_check
          %p391 = pneg %p243
        $region66: #{tpu_custom_call.1} parent=59 // pred_check_branch
          %393 = sbr.rel (%p391) target = $region68
        $region67: #{tpu_custom_call.1} parent=59 // pred_region
          %395 = dma.done [#allocation6], 2048
        $region68: #{tpu_custom_call.1} parent=59 // pred_fallthru
          _
        %s396 = sadd.s32 %s30, %s31
        %p397 = scmp.lt.s32.totalorder %s396, 1
        %s398 = scalar_select %p397, %s396, 1
        %s399 = smul.addr %s398, 8
        %s400 = scalar_lea.vmem %s0, %s399
        %p401 = pneg %p61
        %p402 = pneg %p58
        %s403 = sadd.s32 %s30, %s31
        %p404 = scmp.lt.s32.totalorder %s403, 1
        %s405 = scalar_select %p404, %s403, 1
        %s406 = smul.addr %s405, 8
        %s407 = scalar_lea.vmem %s1, %s406
        %p408 = pneg %p89
        %p409 = pneg %p86
        %s410 = sadd.s32 %s30, %s31
        %p411 = scmp.lt.s32.totalorder %s410, 1
        %s412 = scalar_select %p411, %s410, 1
        %s413 = smul.addr %s412, 8
        %s414 = scalar_lea.vmem %s2, %s413
        %p415 = pneg %p117
        %p416 = pneg %p114
        %p417 = pneg %p138
        %p418 = pneg %p135
        %p419 = pneg %p159
        %p420 = pneg %p156
        %p421 = pneg %p180
        %p422 = pneg %p177
        %p423 = pneg %p201
        %p424 = pneg %p198
        %p425 = pneg %p222
        %p426 = pneg %p219
        %p427 = pneg %p243
        %p428 = pneg %p240
        %p429 = pneg %p264
        %p430 = pneg %p261
        %p431 = pneg %p290
        %p432 = pneg %p287
        %s433 = sand.u32 %s277, 1
        %s434 = scalar_lea.sflag [#allocation4], %s433
        %s435 = sand.u32 %s277, 1
        %s436 = smul.addr %s435, 2
        %s437 = scalar_lea.vmem [#allocation7], %s436
        %s438 = sadd.s32 %s30, %s31
        %p439 = scmp.lt.s32.totalorder %s438, 1
        %s440 = scalar_select %p439, %s438, 1
        %s441 = smul.addr %s440, 8
        %s442 = scalar_lea.vmem %s0, %s441
        %s443 = sadd.s32 %s30, %s31
        %s444 = sadd.s32 %s30, %s31
        %p445 = scmp.lt.s32.totalorder %s444, 1
        %s446 = scalar_select %p445, %s444, 1
        %s447 = smul.addr %s446, 8
        %s448 = scalar_lea.vmem %s1, %s447
        %s449 = sadd.s32 %s30, %s31
        %s450 = sadd.s32 %s30, %s31
        %p451 = scmp.lt.s32.totalorder %s450, 1
        %s452 = scalar_select %p451, %s450, 1
        %s453 = smul.addr %s452, 8
        %s454 = scalar_lea.vmem %s2, %s453
        %s455 = sadd.s32 %s30, %s31
        %p456 = scmp.eq.s32.totalorder %s31, 0
        // Predicated region
        $region69: #{tpu_custom_call.1} parent=59 // pred_check
          %p457 = pneg %p456
        $region70: #{tpu_custom_call.1} parent=59 // pred_check_branch
          %459 = sbr.rel (%p457) target = $region72
        $region71: #{tpu_custom_call.1} parent=59 // pred_region
          %460 = vst [vmem:[%s437] sm:$0x3] 0.0
        $region72: #{tpu_custom_call.1} parent=59 // pred_fallthru
          _
        %v461 = vld [vmem:[%s442] sm:$0xff]
        %v462 = vld [vmem:[%s448] sm:$0xff]
        %v463 = vld [vmem:[%s454] sm:$0xff]
        %v464 = vld [vmem:[%s3] sm:$0xf]
        %v465 = vld [vmem:[%s4] sm:$0x7]
        %vm466 = vcmask 23552
        %v468 = vsel %vm466, %v462, 0
        %vm470 = vcmask 1042432
        %v472 = vsel %vm470, %v465, 0
        %474 = vmatpush.msra.mxu0 0.0
        %475 = vmatpush.msra.mxu0 0.0
        %476 = vmatpush.msra.mxu0 0.0
        %477 = vmatpush.msra.mxu0 0.0
        %478 = vmatpush.msra.mxu0 0.0
        %479 = vmatpush.msra.mxu0 0.0
        %480 = vmatpush.msra.mxu0 0.0
        %481 = vmatpush.msra.mxu0 0.0
        %482 = vmatpush.msra.mxu0 0.0
        %483 = vmatpush.msra.mxu0 0.0
        %484 = vmatpush.msra.mxu0 0.0
        %485 = vmatpush.msra.mxu0 0.0
        %486 = vmatpush.msra.mxu0 0.0
        %487 = vmatpush.msra.mxu0 0.0
        %488 = vmatpush.msra.mxu0 0.0
        %489 = vmatpush.msra.mxu0 %v472
        %490 = vmatmul.f32.gmra.mxu0 %v468
        %v491 = vpop.f32.mrf.mxu0
        %v492 = vadd.f32 0.0, %v491
        %493 = vdwg.mxu0
        %vm494 = vcmask 31744
        %v496 = vsel %vm494, %v461, 0
        %vm498 = vcmask 1043456
        %v500 = vsel %vm498, %v464, 0
        %502 = vmatpush.msra.mxu0 0.0
        %503 = vmatpush.msra.mxu0 0.0
        %504 = vmatpush.msra.mxu0 0.0
        %505 = vmatpush.msra.mxu0 0.0
        %506 = vmatpush.msra.mxu0 0.0
        %507 = vmatpush.msra.mxu0 0.0
        %508 = vmatpush.msra.mxu0 0.0
        %509 = vmatpush.msra.mxu0 0.0
        %510 = vmatpush.msra.mxu0 0.0
        %511 = vmatpush.msra.mxu0 0.0
        %512 = vmatpush.msra.mxu0 0.0
        %513 = vmatpush.msra.mxu0 0.0
        %514 = vmatpush.msra.mxu0 0.0
        %515 = vmatpush.msra.mxu0 0.0
        %516 = vmatpush.msra.mxu0 0.0
        %517 = vmatpush.msra.mxu0 %v500
        %518 = vmatmul.f32.gmra.mxu0 %v496
        %v519 = vpop.f32.mrf.mxu0
        %v520 = vadd.f32 %v492, %v519
        %521 = vdwg.mxu0
        %v522 = vld [vmem:[%s5] sm:$0x1]
        %v524 = vperm.slane %v522, 0
        %v526 = vadd.f32 %v520, %v524
        %v527 = vmax.f32 %v526, 0.0
        %v528 = vld [vmem:[#allocation2] sm:$0xff]
        %v529 = vld [vmem:[#allocation2 + $0x8] sm:$0xff]
        %v530 = vld [vmem:[#allocation2 + $0x10] sm:$0xff]
        %v531 = vld [vmem:[#allocation2 + $0x18] sm:$0xff]
        %v532 = vld [vmem:[#allocation2 + $0x20] sm:$0xff]
        %v533 = vld [vmem:[#allocation2 + $0x28] sm:$0xff]
        %v534 = vld [vmem:[#allocation2 + $0x30] sm:$0xff]
        %v535 = vld [vmem:[#allocation2 + $0x38] sm:$0xff]
        %v536 = vld [vmem:[#allocation2 + $0x40] sm:$0xff]
        %v537 = vld [vmem:[#allocation2 + $0x48] sm:$0xff]
        %v538 = vld [vmem:[#allocation2 + $0x50] sm:$0xff]
        %v539 = vld [vmem:[#allocation2 + $0x58] sm:$0xff]
        %v540 = vld [vmem:[#allocation2 + $0x60] sm:$0xff]
        %v541 = vld [vmem:[#allocation2 + $0x68] sm:$0xff]
        %v542 = vld [vmem:[#allocation2 + $0x70] sm:$0xff]
        %v543 = vld [vmem:[#allocation2 + $0x78] sm:$0xff]
        %v544 = vld [vmem:[%s7] sm:$0x1]
        %v546 = vperm.slane %v544, 0
        %548 = vmatpush.msra.mxu0 %v543
        %549 = vmatpush.msra.mxu0 %v542
        %550 = vmatpush.msra.mxu0 %v541
        %551 = vmatpush.msra.mxu0 %v540
        %552 = vmatpush.msra.mxu0 %v539
        %553 = vmatpush.msra.mxu0 %v538
        %554 = vmatpush.msra.mxu0 %v537
        %555 = vmatpush.msra.mxu0 %v536
        %556 = vmatpush.msra.mxu0 %v535
        %557 = vmatpush.msra.mxu0 %v534
        %558 = vmatpush.msra.mxu0 %v533
        %559 = vmatpush.msra.mxu0 %v532
        %560 = vmatpush.msra.mxu0 %v531
        %561 = vmatpush.msra.mxu0 %v530
        %562 = vmatpush.msra.mxu0 %v529
        %563 = vmatpush.msra.mxu0 %v528
        %564 = vmatmul.f32.gmra.mxu0 %v527
        %v565 = vpop.f32.mrf.mxu0
        %v566 = vadd.f32 %v546, %v565
        %567 = vdwg.mxu0
        %v568 = vmax.f32 %v566, 0.0
        %v569 = vld [vmem:[#allocation5] sm:$0xff]
        %v570 = vld [vmem:[#allocation5 + $0x8] sm:$0xff]
        %v571 = vld [vmem:[#allocation5 + $0x10] sm:$0xff]
        %v572 = vld [vmem:[#allocation5 + $0x18] sm:$0xff]
        %v573 = vld [vmem:[#allocation5 + $0x20] sm:$0xff]
        %v574 = vld [vmem:[#allocation5 + $0x28] sm:$0xff]
        %v575 = vld [vmem:[#allocation5 + $0x30] sm:$0xff]
        %v576 = vld [vmem:[#allocation5 + $0x38] sm:$0xff]
        %v577 = vld [vmem:[#allocation5 + $0x40] sm:$0xff]
        %v578 = vld [vmem:[#allocation5 + $0x48] sm:$0xff]
        %v579 = vld [vmem:[#allocation5 + $0x50] sm:$0xff]
        %v580 = vld [vmem:[#allocation5 + $0x58] sm:$0xff]
        %v581 = vld [vmem:[#allocation5 + $0x60] sm:$0xff]
        %v582 = vld [vmem:[#allocation5 + $0x68] sm:$0xff]
        %v583 = vld [vmem:[#allocation5 + $0x70] sm:$0xff]
        %v584 = vld [vmem:[#allocation5 + $0x78] sm:$0xff]
        %v585 = vld [vmem:[%s9] sm:$0x1]
        %v587 = vperm.slane %v585, 0
        %589 = vmatpush.msra.mxu0 %v584
        %590 = vmatpush.msra.mxu0 %v583
        %591 = vmatpush.msra.mxu0 %v582
        %592 = vmatpush.msra.mxu0 %v581
        %593 = vmatpush.msra.mxu0 %v580
        %594 = vmatpush.msra.mxu0 %v579
        %595 = vmatpush.msra.mxu0 %v578
        %596 = vmatpush.msra.mxu0 %v577
        %597 = vmatpush.msra.mxu0 %v576
        %598 = vmatpush.msra.mxu0 %v575
        %599 = vmatpush.msra.mxu0 %v574
        %600 = vmatpush.msra.mxu0 %v573
        %601 = vmatpush.msra.mxu0 %v572
        %602 = vmatpush.msra.mxu0 %v571
        %603 = vmatpush.msra.mxu0 %v570
        %604 = vmatpush.msra.mxu0 %v569
        %605 = vmatmul.f32.gmra.mxu0 %v568
        %v606 = vpop.f32.mrf.mxu0
        %v607 = vadd.f32 %v587, %v606
        %608 = vdwg.mxu0
        %v609 = vmax.f32 %v607, 0.0
        %vm610 = vcmp.eq.s32.totalorder %v463, 0
        %v611 = vsel %vm610, 1, 0
        %v612 = vcvt.s32.f32 %v611
        %614 = vset.pattern.permute.xlu0 0
        %615 = vperm.xlu0 %614, %v612
        %v616 = vpop.permute.xlu0 %615
        %v618 = vmul.f32 %v609, %v616
        %v619 = vrot.slane %v618, 4
        %v620 = vmax.f32 %v618, %v619
        %v621 = vrot.slane %v620, 2
        %v622 = vmax.f32 %v620, %v621
        %v623 = vrot.slane %v622, 1
        %v624 = vmax.f32 %v622, %v623
        %vm625 = vcmp.eq.s32.totalorder %v463, 1
        %v626 = vsel %vm625, 1, 0
        %v627 = vcvt.s32.f32 %v626
        %629 = vset.pattern.permute.xlu0 0
        %630 = vperm.xlu0 %629, %v627
        %v631 = vpop.permute.xlu0 %630
        %v633 = vmul.f32 %v609, %v631
        %v634 = vrot.slane %v633, 4
        %v635 = vmax.f32 %v633, %v634
        %v636 = vrot.slane %v635, 2
        %v637 = vmax.f32 %v635, %v636
        %v638 = vrot.slane %v637, 1
        %v639 = vmax.f32 %v637, %v638
        %vm640 = vcmask 1040384
        %v641 = vsel %vm640, %v624, %v639
        %v642 = vld [vmem:[%s437] sm:$0x3]
        %v643 = vmax.f32 %v642, %v641
        %644 = vst [vmem:[%s437] sm:$0x3] %v643
        %s645 = sand.u32 %s277, 1
        %s646 = scalar_lea.sflag [#allocation4], %s645
        %s647 = sand.u32 %s277, 1
        %s648 = smul.addr %s647, 2
        %s649 = scalar_lea.vmem [#allocation7], %s648
        // Predicated region
        $region73: #{tpu_custom_call.1} parent=59 // pred_check
          %p650 = pneg %p287
        $region74: #{tpu_custom_call.1} parent=59 // pred_check_branch
          %652 = sbr.rel (%p650) target = $region76
        $region75: #{tpu_custom_call.1} parent=59 // pred_region
          %654 = vsyncadd %s646, 0
          %s655 = smul.addr %s30, 2
          %s656 = scalar_lea.hbm %s10, %s655
          %s658 = sshll.u32 %s649, 4
          %s659 = int_to_ptr.vmem [resolvable:$true] %s658
          %s660 = sshll.u32 %s656, 4
          %s661 = int_to_ptr.hbm [resolvable:$true] %s660
          %663 = dma.vmem_to_hbm [thread:$0]  %s659, 32, %s661, %s646
        $region76: #{tpu_custom_call.1} parent=59 // pred_fallthru
          _
      $region60: #{tpu_custom_call.1} parent=5 // pred_fallthru
        _
      %p664 = scmp.le.s32.totalorder 2, %s21
      // Predicated region
      $region77: #{tpu_custom_call.1} parent=5 // pred_check
        %p665 = pneg %p664
      $region78: #{tpu_custom_call.1} parent=5 // pred_check_branch
        %667 = sbr.rel (%p665) target = $region80
      $region79: #{tpu_custom_call.1} parent=5 // pred_region
        %s668 = ssub.s32 %s21, 2
        // Predicated region
        $region81: #{tpu_custom_call.1} parent=79 // pred_check
          %p669 = pneg %p293
        $region82: #{tpu_custom_call.1} parent=79 // pred_check_branch
          %671 = sbr.rel (%p669) target = $region84
        $region83: #{tpu_custom_call.1} parent=79 // pred_region
          %s672 = sand.u32 %s278, 1
          %s673 = scalar_lea.sflag [#allocation4], %s672
          %s674 = sand.u32 %s278, 1
          %s675 = smul.addr %s674, 2
          %s676 = scalar_lea.vmem [#allocation7], %s675
          %678 = dma.done %s673, 32
        $region84: #{tpu_custom_call.1} parent=79 // pred_fallthru
          _
      $region80: #{tpu_custom_call.1} parent=5 // pred_fallthru
        _
    $region6: #{tpu_custom_call.1} parent=1 // loop_footer
      %s25 = sadd.s32 1, %s21
    $region7: #{tpu_custom_call.1} parent=1 // loop_footer_branch
      %20 = sbr.rel target = $region3
    $region8: #{tpu_custom_call.1} parent=1 // loop_exit
      _
    %679 = vsyncpa [#allocation3], 1
    %s680 = scalar_lea.sflag [#allocation3], 1
    %681 = vsyncpa %s680, 1
    %682 = vsyncpa [#allocation6], 1
    %683 = vsyncpa [#allocation4], 1
    %s684 = scalar_lea.sflag [#allocation4], 1
    %685 = vsyncpa %s684, 1

</llo_original>
